<compile_context>
chip_gen: v7x
topology: tpu7x:2x2x1
jax: 0.10.0
libtpu: 0.0.40
codegen_flags: <defaults>
</compile_context>

<pallas_src>
import numpy as np
import jax
import jax.numpy as jnp
from jax.experimental import pallas as pl
from jax.experimental.pallas import tpu as pltpu


def _vmem():
    # Whole-array-resident VMEM blocks, single grid point: total working set here is < 1 MiB,
    # so a grid / pipeline would be pure per-step overhead (~0.35 us each).
    return pl.BlockSpec(memory_space=pltpu.MemorySpace.VMEM)


# --------------------------- fused forward kernel ----------------------------
def _make_fused_kernel(n_layers, P, k, H, B):
    """B = P*k batch rows; sequence length is fixed at 2 (inner/outer slot)."""

    def kernel(*refs):
        game_ref, s_in_ref, s_out_ref = refs[0], refs[1], refs[2]
        idx = 3
        inner_w = refs[idx:idx + n_layers]; idx += n_layers
        inner_b = refs[idx:idx + n_layers]; idx += n_layers
        outer_w = refs[idx:idx + n_layers]; idx += n_layers
        outer_b = refs[idx:idx + n_layers]; idx += n_layers
        wq_ref, wk_ref, wv_ref, bq_ref, bk_ref, bv_ref, wo_ref, bo_ref = refs[idx:idx + 8]
        o_ref = refs[-1]

        x = game_ref[...]                                    # (N, Din) — loaded once, shared

        # ---- both embedder MLPs (static Python unroll over layers) ----
        hi = x
        for w_ref, b_ref in zip(inner_w, inner_b):
            hi = jnp.maximum(
                jnp.dot(hi, w_ref[...], preferred_element_type=jnp.float32) + b_ref[...], 0.0)
        ho = x
        for w_ref, b_ref in zip(outer_w, outer_b):
            ho = jnp.maximum(
                jnp.dot(ho, w_ref[...], preferred_element_type=jnp.float32) + b_ref[...], 0.0)

        # ---- player gather as one-hot selection matmuls (stays on the MXU, no gather op)
        # rows [0:B)  = inner[pVect == p] for each (player, member)   -> token 0
        # rows [B:2B) = outer[pVect != p] for each (player, member)   -> token 1
        xab = (jnp.dot(s_in_ref[...], hi, preferred_element_type=jnp.float32)
               + jnp.dot(s_out_ref[...], ho, preferred_element_type=jnp.float32))   # (2B, H)

        # ---- MHA projections, computed once for both tokens (scale folded into wq/bq)
        q = jnp.dot(xab, wq_ref[...], preferred_element_type=jnp.float32) + bq_ref[...]
        kk = jnp.dot(xab, wk_ref[...], preferred_element_type=jnp.float32) + bk_ref[...]
        v = jnp.dot(xab, wv_ref[...], preferred_element_type=jnp.float32) + bv_ref[...]
        # TODO(synk): a single (H,3H) fused QKV weight needs lane slicing at 32/64 offsets,
        # which Mosaic may reject at these tile-unaligned widths; kept as 3 dense matmuls.

        # split the two tokens (B is sublane-aligned: B % 8 == 0 at the demo shapes)
        q0, q1 = q[:B], q[B:]
        k0, k1 = kk[:B], kk[B:]
        v0, v1 = v[:B], v[B:]

        # ---- L=2 attention kept fully 2-D: dense (B,H)/(B,1) vregs, no (B,2,2,H) padding
        s00 = jnp.sum(q0 * k0, axis=-1, keepdims=True)       # (B, 1)
        s01 = jnp.sum(q0 * k1, axis=-1, keepdims=True)
        s10 = jnp.sum(q1 * k0, axis=-1, keepdims=True)
        s11 = jnp.sum(q1 * k1, axis=-1, keepdims=True)

        m0 = jnp.maximum(s00, s01)
        e00 = jnp.exp(s00 - m0)
        e01 = jnp.exp(s01 - m0)
        r0 = pl.reciprocal(e00 + e01, approx=True)           # softmax denom on the EUP
        m1 = jnp.maximum(s10, s11)
        e10 = jnp.exp(s10 - m1)
        e11 = jnp.exp(s11 - m1)
        r1 = pl.reciprocal(e10 + e11, approx=True)

        # seq-mean folded before the output projection (linear => exact):
        # mean_l(ctx_l @ Wo + bo) = (0.5*(ctx0+ctx1)) @ Wo + bo  -> one Wo matmul, no divide.
        ctx_mean = 0.5 * ((e00 * r0) * v0 + (e01 * r0) * v1
                          + (e10 * r1) * v0 + (e11 * r1) * v1)                      # (B, H)
        out = (jnp.dot(ctx_mean, wo_ref[...], preferred_element_type=jnp.float32)
               + bo_ref[...])                                                        # (B, H)

        # TODO(synk): a lane-dense (P, k*H) store (k*H = 128 here) needs a minor-dim reshape
        # that Mosaic rejects at these shapes; only the leading-dim split is done in-kernel.
        o_ref[...] = out.reshape(P, k, H)

    return kernel


# --------------------------- AttentionGroupEmbedder --------------------------
class AttentionGroupEmbedder:
    def __init__(self, input_dim, hidden_dim, ff_layers, n_heads=1, *, key):
        assert n_heads == 1
        # TODO(synk): multi-head split (n_heads > 1) not implemented; module default is 1.
        # NOTE: for non-toy sizes choose hidden_dim as a multiple of 128 (MXU / lane fill).
        self.hidden_dim = hidden_dim
        keys = iter(jax.random.split(key, 4 * ff_layers + 8))

        def lin(fan_in, fan_out):
            w = (jax.random.normal(next(keys), (fan_in, fan_out), jnp.float32)
                 / np.sqrt(fan_in)).astype(jnp.float32)
            b = (jax.random.normal(next(keys), (1, fan_out), jnp.float32)
                 * 0.02).astype(jnp.float32)
            return w, b

        dims = [input_dim] + [hidden_dim] * ff_layers
        self.inner_w, self.inner_b = [], []
        self.outer_w, self.outer_b = [], []
        for d_in, d_out in zip(dims[:-1], dims[1:]):
            w, b = lin(d_in, d_out)
            self.inner_w.append(w); self.inner_b.append(b)
        for d_in, d_out in zip(dims[:-1], dims[1:]):
            w, b = lin(d_in, d_out)
            self.outer_w.append(w); self.outer_b.append(b)

        self.mha = {}
        for name in ('q', 'k', 'v', 'o'):
            w, b = lin(hidden_dim, hidden_dim)
            self.mha['w' + name] = w
            self.mha['b' + name] = b
        # fold the 1/sqrt(head_dim) attention scale into the query projection (n_heads == 1)
        scale = jnp.float32(hidden_dim ** -0.5)
        self.mha['wq'] = self.mha['wq'] * scale
        self.mha['bq'] = self.mha['bq'] * scale

        self._sel_cache = {}   # (pVect bytes, players, N) -> (S_inner, S_outer, P, k)

    def _selection(self, pVect, players, n_rows):
        # pVect / players are host-side (they drive Python control flow, as in the reference);
        # the one-hot selection matrices are built once and cached on device.
        pv = np.asarray(pVect)
        players = tuple(int(p) for p in players)
        cache_key = (pv.tobytes(), players, n_rows)
        hit = self._sel_cache.get(cache_key)
        if hit is not None:
            return hit
        P = len(players)
        own_list, oth_list = [], []
        for p in players:
            own = np.nonzero(pv == p)[0]
            oth = np.nonzero(pv != p)[0]
            assert own.size == oth.size, "reference torch.stack requires equal counts"
            own_list.append(own)
            oth_list.append(oth)
        k = int(own_list[0].shape[0])
        B = P * k
        s_inner = np.zeros((2 * B, n_rows), np.float32)
        s_outer = np.zeros((2 * B, n_rows), np.float32)
        for pi in range(P):
            for j in range(k):
                s_inner[pi * k + j, own_list[pi][j]] = 1.0          # token 0: inner[pVect==p]
                s_outer[B + pi * k + j, oth_list[pi][j]] = 1.0      # token 1: outer[pVect!=p]
        entry = (jnp.asarray(s_inner), jnp.asarray(s_outer), P, k)
        self._sel_cache[cache_key] = entry
        return entry

    def __call__(self, gameMat, pVect, players):
        # TODO(synk): reference also builds `pipipi` via torch.tensor(list-of-tensors) and
        # prints a debug comparison; that line errors in torch and is side-effect only.
        N = gameMat.shape[0]
        s_inner, s_outer, P, k = self._selection(pVect, players, N)
        H = self.hidden_dim
        n_layers = len(self.inner_w)
        n_inputs = 3 + 4 * n_layers + 8
        # Single fused kernel: embedders + gather + MHA(L=2) + seq-mean, all VMEM-resident.
        # TODO(synk): when N / hidden_dim scale up (v7x has only 64 MiB VMEM), add a row-tiled
        # grid over N with ("parallel",) dimension_semantics and re-derive vmem_limit_bytes.
        return pl.pallas_call(
            _make_fused_kernel(n_layers, P, k, H, P * k),
            out_shape=jax.ShapeDtypeStruct((P, k, H), jnp.float32),
            in_specs=[_vmem()] * n_inputs,
            out_specs=_vmem(),
            compiler_params=pltpu.CompilerParams(vmem_limit_bytes=32 << 20),
        )(gameMat, s_inner, s_outer,
          *self.inner_w, *self.inner_b, *self.outer_w, *self.outer_b,
          self.mha['wq'], self.mha['wk'], self.mha['wv'],
          self.mha['bq'], self.mha['bk'], self.mha['bv'],
          self.mha['wo'], self.mha['bo'])


if __name__ == "__main__":
    key = jax.random.PRNGKey(0)
    k_param, k_data = jax.random.split(key)

    input_dim, hidden_dim, ff_layers = 8, 32, 2
    N = 8
    gameMat = jax.random.normal(k_data, (N, input_dim), jnp.float32)
    pVect = np.array([0, 0, 0, 0, 1, 1, 1, 1], dtype=np.int32)   # each player owns N/2 rows
    players = [0, 1]

    model = AttentionGroupEmbedder(input_dim, hidden_dim, ff_layers, n_heads=1, key=k_param)
    out = model(gameMat, pVect, players)
    out = jax.block_until_ready(out)

    assert out.shape == (len(players), N // 2, hidden_dim)
    assert bool(jnp.all(jnp.isfinite(out)))
    print("KERNEL_OK")
</pallas_src>

<mosaic_0001>
module attributes {stable_mosaic.version = 11 : i64} {
  func.func @kernel(%arg0: memref<8x8xf32, #tpu.memory_space<vmem>>, %arg1: memref<16x8xf32, #tpu.memory_space<vmem>>, %arg2: memref<16x8xf32, #tpu.memory_space<vmem>>, %arg3: memref<8x32xf32, #tpu.memory_space<vmem>>, %arg4: memref<32x32xf32, #tpu.memory_space<vmem>>, %arg5: memref<1x32xf32, #tpu.memory_space<vmem>>, %arg6: memref<1x32xf32, #tpu.memory_space<vmem>>, %arg7: memref<8x32xf32, #tpu.memory_space<vmem>>, %arg8: memref<32x32xf32, #tpu.memory_space<vmem>>, %arg9: memref<1x32xf32, #tpu.memory_space<vmem>>, %arg10: memref<1x32xf32, #tpu.memory_space<vmem>>, %arg11: memref<32x32xf32, #tpu.memory_space<vmem>>, %arg12: memref<32x32xf32, #tpu.memory_space<vmem>>, %arg13: memref<32x32xf32, #tpu.memory_space<vmem>>, %arg14: memref<1x32xf32, #tpu.memory_space<vmem>>, %arg15: memref<1x32xf32, #tpu.memory_space<vmem>>, %arg16: memref<1x32xf32, #tpu.memory_space<vmem>>, %arg17: memref<32x32xf32, #tpu.memory_space<vmem>>, %arg18: memref<1x32xf32, #tpu.memory_space<vmem>>, %arg19: memref<2x4x32xf32, #tpu.memory_space<vmem>>) attributes {dimension_semantics = [], scalar_prefetch = 0 : i64, scratch_operands = 0 : i64, tpu.core_type = #tpu.core_type<tc>} {
    %c0 = arith.constant 0 : index
    %c0_0 = arith.constant 0 : index
    %0 = vector.load %arg0[%c0, %c0_0] : memref<8x8xf32, #tpu.memory_space<vmem>>, vector<8x8xf32>
    %c0_1 = arith.constant 0 : index
    %c0_2 = arith.constant 0 : index
    %1 = vector.load %arg3[%c0_1, %c0_2] : memref<8x32xf32, #tpu.memory_space<vmem>>, vector<8x32xf32>
    %cst = arith.constant dense<0.000000e+00> : vector<8x32xf32>
    %2 = tpu.matmul %0, %1, %cst {dimension_numbers = #tpu.dot_dimension_numbers<[1], [0], [0], [1], [0, 0, 1, 1], [], []>} : vector<8x8xf32>, vector<8x32xf32>, vector<8x32xf32> -> vector<8x32xf32>
    %c0_3 = arith.constant 0 : index
    %c0_4 = arith.constant 0 : index
    %3 = vector.load %arg5[%c0_3, %c0_4] : memref<1x32xf32, #tpu.memory_space<vmem>>, vector<1x32xf32>
    %4 = vector.broadcast %3 : vector<1x32xf32> to vector<8x32xf32>
    %5 = arith.addf %2, %4 : vector<8x32xf32>
    %cst_5 = arith.constant 0.000000e+00 : f32
    %6 = vector.broadcast %cst_5 : f32 to vector<8x32xf32>
    %7 = arith.maximumf %5, %6 : vector<8x32xf32>
    %c0_6 = arith.constant 0 : index
    %c0_7 = arith.constant 0 : index
    %8 = vector.load %arg4[%c0_6, %c0_7] : memref<32x32xf32, #tpu.memory_space<vmem>>, vector<32x32xf32>
    %cst_8 = arith.constant dense<0.000000e+00> : vector<8x32xf32>
    %9 = tpu.matmul %7, %8, %cst_8 {dimension_numbers = #tpu.dot_dimension_numbers<[1], [0], [0], [1], [0, 0, 1, 1], [], []>} : vector<8x32xf32>, vector<32x32xf32>, vector<8x32xf32> -> vector<8x32xf32>
    %c0_9 = arith.constant 0 : index
    %c0_10 = arith.constant 0 : index
    %10 = vector.load %arg6[%c0_9, %c0_10] : memref<1x32xf32, #tpu.memory_space<vmem>>, vector<1x32xf32>
    %11 = vector.broadcast %10 : vector<1x32xf32> to vector<8x32xf32>
    %12 = arith.addf %9, %11 : vector<8x32xf32>
    %cst_11 = arith.constant 0.000000e+00 : f32
    %13 = vector.broadcast %cst_11 : f32 to vector<8x32xf32>
    %14 = arith.maximumf %12, %13 : vector<8x32xf32>
    %c0_12 = arith.constant 0 : index
    %c0_13 = arith.constant 0 : index
    %15 = vector.load %arg7[%c0_12, %c0_13] : memref<8x32xf32, #tpu.memory_space<vmem>>, vector<8x32xf32>
    %cst_14 = arith.constant dense<0.000000e+00> : vector<8x32xf32>
    %16 = tpu.matmul %0, %15, %cst_14 {dimension_numbers = #tpu.dot_dimension_numbers<[1], [0], [0], [1], [0, 0, 1, 1], [], []>} : vector<8x8xf32>, vector<8x32xf32>, vector<8x32xf32> -> vector<8x32xf32>
    %c0_15 = arith.constant 0 : index
    %c0_16 = arith.constant 0 : index
    %17 = vector.load %arg9[%c0_15, %c0_16] : memref<1x32xf32, #tpu.memory_space<vmem>>, vector<1x32xf32>
    %18 = vector.broadcast %17 : vector<1x32xf32> to vector<8x32xf32>
    %19 = arith.addf %16, %18 : vector<8x32xf32>
    %cst_17 = arith.constant 0.000000e+00 : f32
    %20 = vector.broadcast %cst_17 : f32 to vector<8x32xf32>
    %21 = arith.maximumf %19, %20 : vector<8x32xf32>
    %c0_18 = arith.constant 0 : index
    %c0_19 = arith.constant 0 : index
    %22 = vector.load %arg8[%c0_18, %c0_19] : memref<32x32xf32, #tpu.memory_space<vmem>>, vector<32x32xf32>
    %cst_20 = arith.constant dense<0.000000e+00> : vector<8x32xf32>
    %23 = tpu.matmul %21, %22, %cst_20 {dimension_numbers = #tpu.dot_dimension_numbers<[1], [0], [0], [1], [0, 0, 1, 1], [], []>} : vector<8x32xf32>, vector<32x32xf32>, vector<8x32xf32> -> vector<8x32xf32>
    %c0_21 = arith.constant 0 : index
    %c0_22 = arith.constant 0 : index
    %24 = vector.load %arg10[%c0_21, %c0_22] : memref<1x32xf32, #tpu.memory_space<vmem>>, vector<1x32xf32>
    %25 = vector.broadcast %24 : vector<1x32xf32> to vector<8x32xf32>
    %26 = arith.addf %23, %25 : vector<8x32xf32>
    %cst_23 = arith.constant 0.000000e+00 : f32
    %27 = vector.broadcast %cst_23 : f32 to vector<8x32xf32>
    %28 = arith.maximumf %26, %27 : vector<8x32xf32>
    %c0_24 = arith.constant 0 : index
    %c0_25 = arith.constant 0 : index
    %29 = vector.load %arg1[%c0_24, %c0_25] : memref<16x8xf32, #tpu.memory_space<vmem>>, vector<16x8xf32>
    %cst_26 = arith.constant dense<0.000000e+00> : vector<16x32xf32>
    %30 = tpu.matmul %29, %14, %cst_26 {dimension_numbers = #tpu.dot_dimension_numbers<[1], [0], [0], [1], [0, 0, 1, 1], [], []>} : vector<16x8xf32>, vector<8x32xf32>, vector<16x32xf32> -> vector<16x32xf32>
    %c0_27 = arith.constant 0 : index
    %c0_28 = arith.constant 0 : index
    %31 = vector.load %arg2[%c0_27, %c0_28] : memref<16x8xf32, #tpu.memory_space<vmem>>, vector<16x8xf32>
    %cst_29 = arith.constant dense<0.000000e+00> : vector<16x32xf32>
    %32 = tpu.matmul %31, %28, %cst_29 {dimension_numbers = #tpu.dot_dimension_numbers<[1], [0], [0], [1], [0, 0, 1, 1], [], []>} : vector<16x8xf32>, vector<8x32xf32>, vector<16x32xf32> -> vector<16x32xf32>
    %33 = arith.addf %30, %32 : vector<16x32xf32>
    %c0_30 = arith.constant 0 : index
    %c0_31 = arith.constant 0 : index
    %34 = vector.load %arg11[%c0_30, %c0_31] : memref<32x32xf32, #tpu.memory_space<vmem>>, vector<32x32xf32>
    %cst_32 = arith.constant dense<0.000000e+00> : vector<16x32xf32>
    %35 = tpu.matmul %33, %34, %cst_32 {dimension_numbers = #tpu.dot_dimension_numbers<[1], [0], [0], [1], [0, 0, 1, 1], [], []>} : vector<16x32xf32>, vector<32x32xf32>, vector<16x32xf32> -> vector<16x32xf32>
    %c0_33 = arith.constant 0 : index
    %c0_34 = arith.constant 0 : index
    %36 = vector.load %arg14[%c0_33, %c0_34] : memref<1x32xf32, #tpu.memory_space<vmem>>, vector<1x32xf32>
    %37 = vector.broadcast %36 : vector<1x32xf32> to vector<16x32xf32>
    %38 = arith.addf %35, %37 : vector<16x32xf32>
    %c0_35 = arith.constant 0 : index
    %c0_36 = arith.constant 0 : index
    %39 = vector.load %arg12[%c0_35, %c0_36] : memref<32x32xf32, #tpu.memory_space<vmem>>, vector<32x32xf32>
    %cst_37 = arith.constant dense<0.000000e+00> : vector<16x32xf32>
    %40 = tpu.matmul %33, %39, %cst_37 {dimension_numbers = #tpu.dot_dimension_numbers<[1], [0], [0], [1], [0, 0, 1, 1], [], []>} : vector<16x32xf32>, vector<32x32xf32>, vector<16x32xf32> -> vector<16x32xf32>
    %c0_38 = arith.constant 0 : index
    %c0_39 = arith.constant 0 : index
    %41 = vector.load %arg15[%c0_38, %c0_39] : memref<1x32xf32, #tpu.memory_space<vmem>>, vector<1x32xf32>
    %42 = vector.broadcast %41 : vector<1x32xf32> to vector<16x32xf32>
    %43 = arith.addf %40, %42 : vector<16x32xf32>
    %c0_40 = arith.constant 0 : index
    %c0_41 = arith.constant 0 : index
    %44 = vector.load %arg13[%c0_40, %c0_41] : memref<32x32xf32, #tpu.memory_space<vmem>>, vector<32x32xf32>
    %cst_42 = arith.constant dense<0.000000e+00> : vector<16x32xf32>
    %45 = tpu.matmul %33, %44, %cst_42 {dimension_numbers = #tpu.dot_dimension_numbers<[1], [0], [0], [1], [0, 0, 1, 1], [], []>} : vector<16x32xf32>, vector<32x32xf32>, vector<16x32xf32> -> vector<16x32xf32>
    %c0_43 = arith.constant 0 : index
    %c0_44 = arith.constant 0 : index
    %46 = vector.load %arg16[%c0_43, %c0_44] : memref<1x32xf32, #tpu.memory_space<vmem>>, vector<1x32xf32>
    %47 = vector.broadcast %46 : vector<1x32xf32> to vector<16x32xf32>
    %48 = arith.addf %45, %47 : vector<16x32xf32>
    %49 = vector.extract_strided_slice %38 {offsets = [0, 0], sizes = [8, 32], strides = [1, 1]} : vector<16x32xf32> to vector<8x32xf32>
    %50 = vector.extract_strided_slice %38 {offsets = [8, 0], sizes = [8, 32], strides = [1, 1]} : vector<16x32xf32> to vector<8x32xf32>
    %51 = vector.extract_strided_slice %43 {offsets = [0, 0], sizes = [8, 32], strides = [1, 1]} : vector<16x32xf32> to vector<8x32xf32>
    %52 = vector.extract_strided_slice %43 {offsets = [8, 0], sizes = [8, 32], strides = [1, 1]} : vector<16x32xf32> to vector<8x32xf32>
    %53 = vector.extract_strided_slice %48 {offsets = [0, 0], sizes = [8, 32], strides = [1, 1]} : vector<16x32xf32> to vector<8x32xf32>
    %54 = vector.extract_strided_slice %48 {offsets = [8, 0], sizes = [8, 32], strides = [1, 1]} : vector<16x32xf32> to vector<8x32xf32>
    %55 = arith.mulf %49, %51 : vector<8x32xf32>
    %cst_45 = arith.constant dense<0.000000e+00> : vector<8xf32>
    %56 = vector.multi_reduction <add>, %55, %cst_45 [1] : vector<8x32xf32> to vector<8xf32>
    %57 = vector.shape_cast %56 : vector<8xf32> to vector<8x1xf32>
    %58 = arith.mulf %49, %52 : vector<8x32xf32>
    %cst_46 = arith.constant dense<0.000000e+00> : vector<8xf32>
    %59 = vector.multi_reduction <add>, %58, %cst_46 [1] : vector<8x32xf32> to vector<8xf32>
    %60 = vector.shape_cast %59 : vector<8xf32> to vector<8x1xf32>
    %61 = arith.mulf %50, %51 : vector<8x32xf32>
    %cst_47 = arith.constant dense<0.000000e+00> : vector<8xf32>
    %62 = vector.multi_reduction <add>, %61, %cst_47 [1] : vector<8x32xf32> to vector<8xf32>
    %63 = vector.shape_cast %62 : vector<8xf32> to vector<8x1xf32>
    %64 = arith.mulf %50, %52 : vector<8x32xf32>
    %cst_48 = arith.constant dense<0.000000e+00> : vector<8xf32>
    %65 = vector.multi_reduction <add>, %64, %cst_48 [1] : vector<8x32xf32> to vector<8xf32>
    %66 = vector.shape_cast %65 : vector<8xf32> to vector<8x1xf32>
    %67 = arith.maximumf %57, %60 : vector<8x1xf32>
    %68 = arith.subf %57, %67 : vector<8x1xf32>
    %69 = math.exp %68 : vector<8x1xf32>
    %70 = arith.subf %60, %67 : vector<8x1xf32>
    %71 = math.exp %70 : vector<8x1xf32>
    %72 = arith.addf %69, %71 : vector<8x1xf32>
    %73 = tpu.reciprocal %72 {approx = true} : vector<8x1xf32> -> vector<8x1xf32>
    %74 = arith.maximumf %63, %66 : vector<8x1xf32>
    %75 = arith.subf %63, %74 : vector<8x1xf32>
    %76 = math.exp %75 : vector<8x1xf32>
    %77 = arith.subf %66, %74 : vector<8x1xf32>
    %78 = math.exp %77 : vector<8x1xf32>
    %79 = arith.addf %76, %78 : vector<8x1xf32>
    %80 = tpu.reciprocal %79 {approx = true} : vector<8x1xf32> -> vector<8x1xf32>
    %81 = arith.mulf %69, %73 : vector<8x1xf32>
    %82 = vector.broadcast %81 : vector<8x1xf32> to vector<8x32xf32>
    %83 = arith.mulf %82, %53 : vector<8x32xf32>
    %84 = arith.mulf %71, %73 : vector<8x1xf32>
    %85 = vector.broadcast %84 : vector<8x1xf32> to vector<8x32xf32>
    %86 = arith.mulf %85, %54 : vector<8x32xf32>
    %87 = arith.addf %83, %86 : vector<8x32xf32>
    %88 = arith.mulf %76, %80 : vector<8x1xf32>
    %89 = vector.broadcast %88 : vector<8x1xf32> to vector<8x32xf32>
    %90 = arith.mulf %89, %53 : vector<8x32xf32>
    %91 = arith.addf %87, %90 : vector<8x32xf32>
    %92 = arith.mulf %78, %80 : vector<8x1xf32>
    %93 = vector.broadcast %92 : vector<8x1xf32> to vector<8x32xf32>
    %94 = arith.mulf %93, %54 : vector<8x32xf32>
    %95 = arith.addf %91, %94 : vector<8x32xf32>
    %cst_49 = arith.constant 5.000000e-01 : f32
    %96 = vector.broadcast %cst_49 : f32 to vector<8x32xf32>
    %97 = arith.mulf %96, %95 : vector<8x32xf32>
    %c0_50 = arith.constant 0 : index
    %c0_51 = arith.constant 0 : index
    %98 = vector.load %arg17[%c0_50, %c0_51] : memref<32x32xf32, #tpu.memory_space<vmem>>, vector<32x32xf32>
    %cst_52 = arith.constant dense<0.000000e+00> : vector<8x32xf32>
    %99 = tpu.matmul %97, %98, %cst_52 {dimension_numbers = #tpu.dot_dimension_numbers<[1], [0], [0], [1], [0, 0, 1, 1], [], []>} : vector<8x32xf32>, vector<32x32xf32>, vector<8x32xf32> -> vector<8x32xf32>
    %c0_53 = arith.constant 0 : index
    %c0_54 = arith.constant 0 : index
    %100 = vector.load %arg18[%c0_53, %c0_54] : memref<1x32xf32, #tpu.memory_space<vmem>>, vector<1x32xf32>
    %101 = vector.broadcast %100 : vector<1x32xf32> to vector<8x32xf32>
    %102 = arith.addf %99, %101 : vector<8x32xf32>
    %103 = vector.shape_cast %102 : vector<8x32xf32> to vector<2x4x32xf32>
    %c0_55 = arith.constant 0 : index
    %c0_56 = arith.constant 0 : index
    %c0_57 = arith.constant 0 : index
    %104 = vector.load %arg19[%c0_55, %c0_56, %c0_57] : memref<2x4x32xf32, #tpu.memory_space<vmem>>, vector<2x4x32xf32>
    tpu.vector_store %arg19[%c0_55, %c0_56, %c0_57], %103 {strides = array<i32>} : memref<2x4x32xf32, #tpu.memory_space<vmem>>, vector<2x4x32xf32>,
    return
  }
}

</mosaic_0001>

<llo_original>
// kernel: tpu_custom_call.1
$region0: #{tpu_custom_call.1}
  #allocation0 [shape = 'u32[]', space=smem, size = 0x4, offset = 0x4, fixed_abs, tag = 'smem constant byte address 0x4 - core index']
  #allocation1 [shape = 'u32[144,128]{1,0:T(1,128)}', space=vmem, size = 0x12000, scoped, tag = 'internal scratch']
  %s0 = inlined_call_operand.hbm [shape: f32[8,8], index: 0, kind: input, shape index: {}]
  %s1 = inlined_call_operand.vmem [shape: f32[16,8], index: 1, kind: input, shape index: {}]
  %s2 = inlined_call_operand.vmem [shape: f32[16,8], index: 2, kind: input, shape index: {}]
  %s3 = inlined_call_operand.hbm [shape: f32[8,32], index: 3, kind: input, shape index: {}]
  %s4 = inlined_call_operand.vmem [shape: f32[32,32], index: 4, kind: input, shape index: {}]
  %s5 = inlined_call_operand.vmem [shape: f32[1,32], index: 5, kind: input, shape index: {}]
  %s6 = inlined_call_operand.hbm [shape: f32[1,32], index: 6, kind: input, shape index: {}]
  %s7 = inlined_call_operand.hbm [shape: f32[8,32], index: 7, kind: input, shape index: {}]
  %s8 = inlined_call_operand.vmem [shape: f32[32,32], index: 8, kind: input, shape index: {}]
  %s9 = inlined_call_operand.hbm [shape: f32[1,32], index: 9, kind: input, shape index: {}]
  %s10 = inlined_call_operand.hbm [shape: f32[1,32], index: 10, kind: input, shape index: {}]
  %s11 = inlined_call_operand.hbm [shape: f32[32,32], index: 11, kind: input, shape index: {}]
  %s12 = inlined_call_operand.hbm [shape: f32[32,32], index: 12, kind: input, shape index: {}]
  %s13 = inlined_call_operand.vmem [shape: f32[32,32], index: 13, kind: input, shape index: {}]
  %s14 = inlined_call_operand.vmem [shape: f32[1,32], index: 14, kind: input, shape index: {}]
  %s15 = inlined_call_operand.vmem [shape: f32[1,32], index: 15, kind: input, shape index: {}]
  %s16 = inlined_call_operand.vmem [shape: f32[1,32], index: 16, kind: input, shape index: {}]
  %s17 = inlined_call_operand.hbm [shape: f32[32,32], index: 17, kind: input, shape index: {}]
  %s18 = inlined_call_operand.vmem [shape: f32[1,32], index: 18, kind: input, shape index: {}]
  %s19 = inlined_call_operand.hbm [shape: f32[2,4,32], index: 19, kind: output, shape index: {}]
  %s20 = sld [smem:[#allocation0]]
  $region122: #{tpu_custom_call.1} parent=0
    _
  %s22 = ssub.s32 1, %s20
  %s23 = scalar_select 0, %s22, %s20
  $region1: #{tpu_custom_call.1} parent=0
    #allocation2 [shape = 'u8[4096]{0}', space=vmem, size = 0x1000, scoped, tag = 'input window, operand 0, single buffered']
    #allocation3 [shape = 's32[1]{0}', space=sflag, size = 0x4, scoped, tag = 'scoped memory for tpu_custom_call.1']
    #allocation4 [shape = 's32[1]{0}', space=sflag, size = 0x4, scoped, tag = 'scoped memory for tpu_custom_call.1']
    #allocation5 [shape = 'u8[4096]{0}', space=vmem, size = 0x1000, scoped, tag = 'input window, operand 3, single buffered']
    #allocation6 [shape = 's32[1]{0}', space=sflag, size = 0x4, scoped, tag = 'scoped memory for tpu_custom_call.1']
    #allocation7 [shape = 'u8[512]{0}', space=vmem, size = 0x400, scoped, tag = 'input window, operand 6, single buffered']
    #allocation8 [shape = 'u8[4096]{0}', space=vmem, size = 0x1000, scoped, tag = 'input window, operand 7, single buffered']
    #allocation9 [shape = 's32[1]{0}', space=sflag, size = 0x4, scoped, tag = 'scoped memory for tpu_custom_call.1']
    #allocation10 [shape = 'u8[512]{0}', space=vmem, size = 0x400, scoped, tag = 'input window, operand 9, single buffered']
    #allocation11 [shape = 'u8[512]{0}', space=vmem, size = 0x400, scoped, tag = 'input window, operand 10, single buffered']
    #allocation12 [shape = 's32[1]{0}', space=sflag, size = 0x4, scoped, tag = 'scoped memory for tpu_custom_call.1']
    #allocation13 [shape = 'u8[16384]{0}', space=vmem, size = 0x4000, scoped, tag = 'input window, operand 11, single buffered']
    #allocation14 [shape = 'u8[16384]{0}', space=vmem, size = 0x4000, scoped, tag = 'input window, operand 12, single buffered']
    #allocation15 [shape = 's32[1]{0}', space=sflag, size = 0x4, scoped, tag = 'scoped memory for tpu_custom_call.1']
    #allocation16 [shape = 'u8[16384]{0}', space=vmem, size = 0x4000, scoped, tag = 'input window, operand 17, single buffered']
    #allocation17 [shape = 'u8[4096]{0}', space=vmem, size = 0x1000, scoped, tag = 'output window, operand 0, single buffered']
    %24 = vsyncpa [#allocation3], 0
    %25 = vsyncpa [#allocation6], 0
    %26 = vsyncpa [#allocation9], 0
    %27 = vsyncpa [#allocation12], 0
    %28 = vsyncpa [#allocation15], 0
    %29 = vsyncpa [#allocation4], 0
    // Predicated region
    $region2: #{tpu_custom_call.1} parent=1 // pred_check
      _
    $region3: #{tpu_custom_call.1} parent=1 // pred_check_branch
      %31 = sbr.rel (0) target = $region5
    $region4: #{tpu_custom_call.1} parent=1 // pred_region
      %s33 = ssub.s32 128, 128
      %34 = vsyncadd [#allocation3], %s33
      %s36 = sshll.u32 [#allocation2], 4
      %s37 = int_to_ptr.vmem [resolvable:$true] %s36
      %39 = dma.hbm_to_vmem [thread:$0]  %s0, 128, %s37, [#allocation3]
    $region5: #{tpu_custom_call.1} parent=1 // pred_fallthru
      _
    // Predicated region
    $region6: #{tpu_custom_call.1} parent=1 // pred_check
      _
    $region7: #{tpu_custom_call.1} parent=1 // pred_check_branch
      %41 = sbr.rel (0) target = $region9
    $region8: #{tpu_custom_call.1} parent=1 // pred_region
      _
    $region9: #{tpu_custom_call.1} parent=1 // pred_fallthru
      _
    // Predicated region
    $region10: #{tpu_custom_call.1} parent=1 // pred_check
      _
    $region11: #{tpu_custom_call.1} parent=1 // pred_check_branch
      %43 = sbr.rel (0) target = $region13
    $region12: #{tpu_custom_call.1} parent=1 // pred_region
      _
    $region13: #{tpu_custom_call.1} parent=1 // pred_fallthru
      _
    // Predicated region
    $region14: #{tpu_custom_call.1} parent=1 // pred_check
      _
    $region15: #{tpu_custom_call.1} parent=1 // pred_check_branch
      %45 = sbr.rel (0) target = $region17
    $region16: #{tpu_custom_call.1} parent=1 // pred_region
      %s47 = ssub.s32 128, 128
      %48 = vsyncadd [#allocation6], %s47
      %s50 = sshll.u32 [#allocation5], 4
      %s51 = int_to_ptr.vmem [resolvable:$true] %s50
      %53 = dma.hbm_to_vmem [thread:$0]  %s3, 128, %s51, [#allocation6]
    $region17: #{tpu_custom_call.1} parent=1 // pred_fallthru
      _
    // Predicated region
    $region18: #{tpu_custom_call.1} parent=1 // pred_check
      _
    $region19: #{tpu_custom_call.1} parent=1 // pred_check_branch
      %55 = sbr.rel (0) target = $region21
    $region20: #{tpu_custom_call.1} parent=1 // pred_region
      _
    $region21: #{tpu_custom_call.1} parent=1 // pred_fallthru
      _
    // Predicated region
    $region22: #{tpu_custom_call.1} parent=1 // pred_check
      _
    $region23: #{tpu_custom_call.1} parent=1 // pred_check_branch
      %57 = sbr.rel (0) target = $region25
    $region24: #{tpu_custom_call.1} parent=1 // pred_region
      _
    $region25: #{tpu_custom_call.1} parent=1 // pred_fallthru
      _
    // Predicated region
    $region26: #{tpu_custom_call.1} parent=1 // pred_check
      _
    $region27: #{tpu_custom_call.1} parent=1 // pred_check_branch
      %59 = sbr.rel (0) target = $region29
    $region28: #{tpu_custom_call.1} parent=1 // pred_region
      %s61 = ssub.s32 16, 16
      %62 = vsyncadd [#allocation6], %s61
      %s64 = sshll.u32 [#allocation7], 4
      %s65 = int_to_ptr.vmem [resolvable:$true] %s64
      %67 = dma.hbm_to_vmem [thread:$0]  %s6, 16, %s65, [#allocation6]
    $region29: #{tpu_custom_call.1} parent=1 // pred_fallthru
      _
    // Predicated region
    $region30: #{tpu_custom_call.1} parent=1 // pred_check
      _
    $region31: #{tpu_custom_call.1} parent=1 // pred_check_branch
      %69 = sbr.rel (0) target = $region33
    $region32: #{tpu_custom_call.1} parent=1 // pred_region
      %s71 = ssub.s32 128, 128
      %72 = vsyncadd [#allocation9], %s71
      %s74 = sshll.u32 [#allocation8], 4
      %s75 = int_to_ptr.vmem [resolvable:$true] %s74
      %77 = dma.hbm_to_vmem [thread:$0]  %s7, 128, %s75, [#allocation9]
    $region33: #{tpu_custom_call.1} parent=1 // pred_fallthru
      _
    // Predicated region
    $region34: #{tpu_custom_call.1} parent=1 // pred_check
      _
    $region35: #{tpu_custom_call.1} parent=1 // pred_check_branch
      %79 = sbr.rel (0) target = $region37
    $region36: #{tpu_custom_call.1} parent=1 // pred_region
      _
    $region37: #{tpu_custom_call.1} parent=1 // pred_fallthru
      _
    // Predicated region
    $region38: #{tpu_custom_call.1} parent=1 // pred_check
      _
    $region39: #{tpu_custom_call.1} parent=1 // pred_check_branch
      %81 = sbr.rel (0) target = $region41
    $region40: #{tpu_custom_call.1} parent=1 // pred_region
      %s83 = ssub.s32 16, 16
      %84 = vsyncadd [#allocation9], %s83
      %s86 = sshll.u32 [#allocation10], 4
      %s87 = int_to_ptr.vmem [resolvable:$true] %s86
      %89 = dma.hbm_to_vmem [thread:$0]  %s9, 16, %s87, [#allocation9]
    $region41: #{tpu_custom_call.1} parent=1 // pred_fallthru
      _
    // Predicated region
    $region42: #{tpu_custom_call.1} parent=1 // pred_check
      _
    $region43: #{tpu_custom_call.1} parent=1 // pred_check_branch
      %91 = sbr.rel (0) target = $region45
    $region44: #{tpu_custom_call.1} parent=1 // pred_region
      %s93 = ssub.s32 16, 16
      %94 = vsyncadd [#allocation12], %s93
      %s96 = sshll.u32 [#allocation11], 4
      %s97 = int_to_ptr.vmem [resolvable:$true] %s96
      %99 = dma.hbm_to_vmem [thread:$0]  %s10, 16, %s97, [#allocation12]
    $region45: #{tpu_custom_call.1} parent=1 // pred_fallthru
      _
    // Predicated region
    $region46: #{tpu_custom_call.1} parent=1 // pred_check
      _
    $region47: #{tpu_custom_call.1} parent=1 // pred_check_branch
      %101 = sbr.rel (0) target = $region49
    $region48: #{tpu_custom_call.1} parent=1 // pred_region
      %s103 = ssub.s32 512, 512
      %104 = vsyncadd [#allocation12], %s103
      %s105 = sshll.u32 [#allocation13], 4
      %s106 = int_to_ptr.vmem [resolvable:$true] %s105
      %111 = dma.hbm_to_vmem [thread:$0]  %s11, 512, %s106, [#allocation12], 128, 128, 8
    $region49: #{tpu_custom_call.1} parent=1 // pred_fallthru
      _
    // Predicated region
    $region50: #{tpu_custom_call.1} parent=1 // pred_check
      _
    $region51: #{tpu_custom_call.1} parent=1 // pred_check_branch
      %113 = sbr.rel (0) target = $region53
    $region52: #{tpu_custom_call.1} parent=1 // pred_region
      %s115 = ssub.s32 512, 512
      %116 = vsyncadd [#allocation15], %s115
      %s117 = sshll.u32 [#allocation14], 4
      %s118 = int_to_ptr.vmem [resolvable:$true] %s117
      %123 = dma.hbm_to_vmem [thread:$0]  %s12, 512, %s118, [#allocation15], 128, 128, 8
    $region53: #{tpu_custom_call.1} parent=1 // pred_fallthru
      _
    // Predicated region
    $region54: #{tpu_custom_call.1} parent=1 // pred_check
      _
    $region55: #{tpu_custom_call.1} parent=1 // pred_check_branch
      %125 = sbr.rel (0) target = $region57
    $region56: #{tpu_custom_call.1} parent=1 // pred_region
      _
    $region57: #{tpu_custom_call.1} parent=1 // pred_fallthru
      _
    // Predicated region
    $region58: #{tpu_custom_call.1} parent=1 // pred_check
      _
    $region59: #{tpu_custom_call.1} parent=1 // pred_check_branch
      %127 = sbr.rel (0) target = $region61
    $region60: #{tpu_custom_call.1} parent=1 // pred_region
      _
    $region61: #{tpu_custom_call.1} parent=1 // pred_fallthru
      _
    // Predicated region
    $region62: #{tpu_custom_call.1} parent=1 // pred_check
      _
    $region63: #{tpu_custom_call.1} parent=1 // pred_check_branch
      %129 = sbr.rel (0) target = $region65
    $region64: #{tpu_custom_call.1} parent=1 // pred_region
      _
    $region65: #{tpu_custom_call.1} parent=1 // pred_fallthru
      _
    // Predicated region
    $region66: #{tpu_custom_call.1} parent=1 // pred_check
      _
    $region67: #{tpu_custom_call.1} parent=1 // pred_check_branch
      %131 = sbr.rel (0) target = $region69
    $region68: #{tpu_custom_call.1} parent=1 // pred_region
      _
    $region69: #{tpu_custom_call.1} parent=1 // pred_fallthru
      _
    // Predicated region
    $region70: #{tpu_custom_call.1} parent=1 // pred_check
      _
    $region71: #{tpu_custom_call.1} parent=1 // pred_check_branch
      %133 = sbr.rel (0) target = $region73
    $region72: #{tpu_custom_call.1} parent=1 // pred_region
      %s135 = ssub.s32 512, 512
      %136 = vsyncadd [#allocation15], %s135
      %s137 = sshll.u32 [#allocation16], 4
      %s138 = int_to_ptr.vmem [resolvable:$true] %s137
      %143 = dma.hbm_to_vmem [thread:$0]  %s17, 512, %s138, [#allocation15], 128, 128, 8
    $region73: #{tpu_custom_call.1} parent=1 // pred_fallthru
      _
    // Predicated region
    $region74: #{tpu_custom_call.1} parent=1 // pred_check
      _
    $region75: #{tpu_custom_call.1} parent=1 // pred_check_branch
      %145 = sbr.rel (0) target = $region77
    $region76: #{tpu_custom_call.1} parent=1 // pred_region
      _
    $region77: #{tpu_custom_call.1} parent=1 // pred_fallthru
      _
    // Predicated region
    $region78: #{tpu_custom_call.1} parent=1 // pred_check
      _
    $region79: #{tpu_custom_call.1} parent=1 // pred_check_branch
      %147 = sbr.rel (0) target = $region81
    $region80: #{tpu_custom_call.1} parent=1 // pred_region
      %148 = dma.done [#allocation3], 128
    $region81: #{tpu_custom_call.1} parent=1 // pred_fallthru
      _
    // Predicated region
    $region82: #{tpu_custom_call.1} parent=1 // pred_check
      _
    $region83: #{tpu_custom_call.1} parent=1 // pred_check_branch
      %150 = sbr.rel (0) target = $region85
    $region84: #{tpu_custom_call.1} parent=1 // pred_region
      %151 = dma.done [#allocation6], 128
    $region85: #{tpu_custom_call.1} parent=1 // pred_fallthru
      _
    // Predicated region
    $region86: #{tpu_custom_call.1} parent=1 // pred_check
      _
    $region87: #{tpu_custom_call.1} parent=1 // pred_check_branch
      %153 = sbr.rel (0) target = $region89
    $region88: #{tpu_custom_call.1} parent=1 // pred_region
      %154 = dma.done [#allocation6], 16
    $region89: #{tpu_custom_call.1} parent=1 // pred_fallthru
      _
    // Predicated region
    $region90: #{tpu_custom_call.1} parent=1 // pred_check
      _
    $region91: #{tpu_custom_call.1} parent=1 // pred_check_branch
      %156 = sbr.rel (0) target = $region93
    $region92: #{tpu_custom_call.1} parent=1 // pred_region
      %157 = dma.done [#allocation9], 128
    $region93: #{tpu_custom_call.1} parent=1 // pred_fallthru
      _
    // Predicated region
    $region94: #{tpu_custom_call.1} parent=1 // pred_check
      _
    $region95: #{tpu_custom_call.1} parent=1 // pred_check_branch
      %159 = sbr.rel (0) target = $region97
    $region96: #{tpu_custom_call.1} parent=1 // pred_region
      %160 = dma.done [#allocation9], 16
    $region97: #{tpu_custom_call.1} parent=1 // pred_fallthru
      _
    // Predicated region
    $region98: #{tpu_custom_call.1} parent=1 // pred_check
      _
    $region99: #{tpu_custom_call.1} parent=1 // pred_check_branch
      %162 = sbr.rel (0) target = $region101
    $region100: #{tpu_custom_call.1} parent=1 // pred_region
      %163 = dma.done [#allocation12], 16
    $region101: #{tpu_custom_call.1} parent=1 // pred_fallthru
      _
    // Predicated region
    $region102: #{tpu_custom_call.1} parent=1 // pred_check
      _
    $region103: #{tpu_custom_call.1} parent=1 // pred_check_branch
      %165 = sbr.rel (0) target = $region105
    $region104: #{tpu_custom_call.1} parent=1 // pred_region
      %166 = dma.done [#allocation12], 512
    $region105: #{tpu_custom_call.1} parent=1 // pred_fallthru
      _
    // Predicated region
    $region106: #{tpu_custom_call.1} parent=1 // pred_check
      _
    $region107: #{tpu_custom_call.1} parent=1 // pred_check_branch
      %168 = sbr.rel (0) target = $region109
    $region108: #{tpu_custom_call.1} parent=1 // pred_region
      %169 = dma.done [#allocation15], 512
    $region109: #{tpu_custom_call.1} parent=1 // pred_fallthru
      _
    // Predicated region
    $region110: #{tpu_custom_call.1} parent=1 // pred_check
      _
    $region111: #{tpu_custom_call.1} parent=1 // pred_check_branch
      %171 = sbr.rel (0) target = $region113
    $region112: #{tpu_custom_call.1} parent=1 // pred_region
      %172 = dma.done [#allocation15], 512
    $region113: #{tpu_custom_call.1} parent=1 // pred_fallthru
      _
    %v173 = vld [vmem:[#allocation2] sm:$0xff]
    %v174 = vld [vmem:[#allocation5] sm:$0xff]
    %v175 = vld [vmem:[%s5] sm:$0x1]
    %v177 = vlaneseq
    %v178 = vshrl.u32 %v177, 7
    %v179 = vsub.s32 0, %v178
    %v180 = vrot.slane %v175, %v179
    %vm182 = vcmask 64512
    %v184 = vsel %vm182, %v173, 0
    %186 = vmatprep.subr.mxu0 0.0
    %187 = vmatpush1.msra.mxu0 %v174
    %188 = vmatprep.subr.mxu0 0.0
    %189 = vmatpush1.msra.mxu0 0.0
    %190 = vmatprep.subr.mxu0 0.0
    %191 = vmatpush1.msra.mxu0 0.0
    %192 = vmatprep.subr.mxu0 0.0
    %193 = vmatpush1.msra.mxu0 0.0
    %194 = vmatprep.subr.mxu0 0.0
    %195 = vmatpush1.msra.mxu0 0.0
    %196 = vmatprep.subr.mxu0 0.0
    %197 = vmatpush1.msra.mxu0 0.0
    %198 = vmatprep.subr.mxu0 0.0
    %199 = vmatpush1.msra.mxu0 0.0
    %200 = vmatprep.subr.mxu0 0.0
    %201 = vmatpush1.msra.mxu0 0.0
    %202 = vmatprep.subr.mxu0 0.0
    %203 = vmatpush1.msra.mxu0 0.0
    %204 = vmatprep.subr.mxu0 0.0
    %205 = vmatpush1.msra.mxu0 0.0
    %206 = vmatprep.subr.mxu0 0.0
    %207 = vmatpush1.msra.mxu0 0.0
    %208 = vmatprep.subr.mxu0 0.0
    %209 = vmatpush1.msra.mxu0 0.0
    %210 = vmatprep.subr.mxu0 0.0
    %211 = vmatpush1.msra.mxu0 0.0
    %212 = vmatprep.subr.mxu0 0.0
    %213 = vmatpush1.msra.mxu0 0.0
    %214 = vmatprep.subr.mxu0 0.0
    %215 = vmatpush1.msra.mxu0 0.0
    %216 = vmatprep.subr.mxu0 0.0
    %217 = vmatpush1.msra.mxu0 0.0
    %218 = vmatprep.subr.mxu0 0.0
    %219 = vmatpush1.msra.mxu0 0.0
    %220 = vmatprep.subr.mxu0 0.0
    %221 = vmatpush1.msra.mxu0 0.0
    %222 = vmatprep.subr.mxu0 0.0
    %223 = vmatpush1.msra.mxu0 0.0
    %224 = vmatprep.subr.mxu0 0.0
    %225 = vmatpush1.msra.mxu0 0.0
    %226 = vmatprep.subr.mxu0 0.0
    %227 = vmatpush1.msra.mxu0 0.0
    %228 = vmatprep.subr.mxu0 0.0
    %229 = vmatpush1.msra.mxu0 0.0
    %230 = vmatprep.subr.mxu0 0.0
    %231 = vmatpush1.msra.mxu0 0.0
    %232 = vmatprep.subr.mxu0 0.0
    %233 = vmatpush1.msra.mxu0 0.0
    %234 = vmatprep.subr.mxu0 0.0
    %235 = vmatpush1.msra.mxu0 0.0
    %236 = vmatprep.subr.mxu0 0.0
    %237 = vmatpush1.msra.mxu0 0.0
    %238 = vmatprep.subr.mxu0 0.0
    %239 = vmatpush1.msra.mxu0 0.0
    %240 = vmatprep.subr.mxu0 0.0
    %241 = vmatpush1.msra.mxu0 0.0
    %242 = vmatprep.subr.mxu0 0.0
    %243 = vmatpush1.msra.mxu0 0.0
    %244 = vmatprep.subr.mxu0 0.0
    %245 = vmatpush1.msra.mxu0 0.0
    %246 = vmatprep.subr.mxu0 0.0
    %247 = vmatpush1.msra.mxu0 0.0
    %248 = vmatprep.subr.mxu0 0.0
    %249 = vmatpush1.msra.mxu0 0.0
    %250 = vmatprep.mubr.f32.mxu0 0.0
    %251 = vmatmul.mubr.f32.gmra.mrb[0].mxu0 %v184
    %v252 = vpop.f32.mrb[0].mxu0
    %v253 = vadd.f32 %v180, %v252
    %v254 = vpop.f32.mrb[0].mxu0
    %255 = vdwg.mxu0
    %v256 = vmax.f32 %v253, 0.0
    %v257 = vld [vmem:[%s4] sm:$0xff]
    %v258 = vld [vmem:[%s4 + $0x8] sm:$0xff]
    %v259 = vld [vmem:[%s4 + $0x10] sm:$0xff]
    %v260 = vld [vmem:[%s4 + $0x18] sm:$0xff]
    %v261 = vld [vmem:[#allocation7] sm:$0x1]
    %v263 = vlaneseq
    %v264 = vshrl.u32 %v263, 7
    %v265 = vsub.s32 0, %v264
    %v266 = vrot.slane %v261, %v265
    %vm268 = vcmask 261120
    %v270 = vsel %vm268, %v256, 0
    %272 = vmatprep.subr.mxu0 0.0
    %273 = vmatpush1.msra.mxu0 %v257
    %274 = vmatprep.subr.mxu0 0.0
    %275 = vmatpush1.msra.mxu0 %v258
    %276 = vmatprep.subr.mxu0 0.0
    %277 = vmatpush1.msra.mxu0 %v259
    %278 = vmatprep.subr.mxu0 0.0
    %279 = vmatpush1.msra.mxu0 %v260
    %280 = vmatprep.subr.mxu0 0.0
    %281 = vmatpush1.msra.mxu0 0.0
    %282 = vmatprep.subr.mxu0 0.0
    %283 = vmatpush1.msra.mxu0 0.0
    %284 = vmatprep.subr.mxu0 0.0
    %285 = vmatpush1.msra.mxu0 0.0
    %286 = vmatprep.subr.mxu0 0.0
    %287 = vmatpush1.msra.mxu0 0.0
    %288 = vmatprep.subr.mxu0 0.0
    %289 = vmatpush1.msra.mxu0 0.0
    %290 = vmatprep.subr.mxu0 0.0
    %291 = vmatpush1.msra.mxu0 0.0
    %292 = vmatprep.subr.mxu0 0.0
    %293 = vmatpush1.msra.mxu0 0.0
    %294 = vmatprep.subr.mxu0 0.0
    %295 = vmatpush1.msra.mxu0 0.0
    %296 = vmatprep.subr.mxu0 0.0
    %297 = vmatpush1.msra.mxu0 0.0
    %298 = vmatprep.subr.mxu0 0.0
    %299 = vmatpush1.msra.mxu0 0.0
    %300 = vmatprep.subr.mxu0 0.0
    %301 = vmatpush1.msra.mxu0 0.0
    %302 = vmatprep.subr.mxu0 0.0
    %303 = vmatpush1.msra.mxu0 0.0
    %304 = vmatprep.subr.mxu0 0.0
    %305 = vmatpush1.msra.mxu0 0.0
    %306 = vmatprep.subr.mxu0 0.0
    %307 = vmatpush1.msra.mxu0 0.0
    %308 = vmatprep.subr.mxu0 0.0
    %309 = vmatpush1.msra.mxu0 0.0
    %310 = vmatprep.subr.mxu0 0.0
    %311 = vmatpush1.msra.mxu0 0.0
    %312 = vmatprep.subr.mxu0 0.0
    %313 = vmatpush1.msra.mxu0 0.0
    %314 = vmatprep.subr.mxu0 0.0
    %315 = vmatpush1.msra.mxu0 0.0
    %316 = vmatprep.subr.mxu0 0.0
    %317 = vmatpush1.msra.mxu0 0.0
    %318 = vmatprep.subr.mxu0 0.0
    %319 = vmatpush1.msra.mxu0 0.0
    %320 = vmatprep.subr.mxu0 0.0
    %321 = vmatpush1.msra.mxu0 0.0
    %322 = vmatprep.subr.mxu0 0.0
    %323 = vmatpush1.msra.mxu0 0.0
    %324 = vmatprep.subr.mxu0 0.0
    %325 = vmatpush1.msra.mxu0 0.0
    %326 = vmatprep.subr.mxu0 0.0
    %327 = vmatpush1.msra.mxu0 0.0
    %328 = vmatprep.subr.mxu0 0.0
    %329 = vmatpush1.msra.mxu0 0.0
    %330 = vmatprep.subr.mxu0 0.0
    %331 = vmatpush1.msra.mxu0 0.0
    %332 = vmatprep.subr.mxu0 0.0
    %333 = vmatpush1.msra.mxu0 0.0
    %334 = vmatprep.subr.mxu0 0.0
    %335 = vmatpush1.msra.mxu0 0.0
    %336 = vmatprep.mubr.f32.mxu0 0.0
    %337 = vmatmul.mubr.f32.gmra.mrb[0].mxu0 %v270
    %v338 = vpop.f32.mrb[0].mxu0
    %v339 = vadd.f32 %v266, %v338
    %v340 = vpop.f32.mrb[0].mxu0
    %341 = vdwg.mxu0
    %v342 = vmax.f32 %v339, 0.0
    %v343 = vld [vmem:[#allocation8] sm:$0xff]
    %v344 = vld [vmem:[#allocation10] sm:$0x1]
    %v346 = vlaneseq
    %v347 = vshrl.u32 %v346, 7
    %v348 = vsub.s32 0, %v347
    %v349 = vrot.slane %v344, %v348
    %351 = vmatprep.subr.mxu0 0.0
    %352 = vmatpush1.msra.mxu0 %v343
    %353 = vmatprep.subr.mxu0 0.0
    %354 = vmatpush1.msra.mxu0 0.0
    %355 = vmatprep.subr.mxu0 0.0
    %356 = vmatpush1.msra.mxu0 0.0
    %357 = vmatprep.subr.mxu0 0.0
    %358 = vmatpush1.msra.mxu0 0.0
    %359 = vmatprep.subr.mxu0 0.0
    %360 = vmatpush1.msra.mxu0 0.0
    %361 = vmatprep.subr.mxu0 0.0
    %362 = vmatpush1.msra.mxu0 0.0
    %363 = vmatprep.subr.mxu0 0.0
    %364 = vmatpush1.msra.mxu0 0.0
    %365 = vmatprep.subr.mxu0 0.0
    %366 = vmatpush1.msra.mxu0 0.0
    %367 = vmatprep.subr.mxu0 0.0
    %368 = vmatpush1.msra.mxu0 0.0
    %369 = vmatprep.subr.mxu0 0.0
    %370 = vmatpush1.msra.mxu0 0.0
    %371 = vmatprep.subr.mxu0 0.0
    %372 = vmatpush1.msra.mxu0 0.0
    %373 = vmatprep.subr.mxu0 0.0
    %374 = vmatpush1.msra.mxu0 0.0
    %375 = vmatprep.subr.mxu0 0.0
    %376 = vmatpush1.msra.mxu0 0.0
    %377 = vmatprep.subr.mxu0 0.0
    %378 = vmatpush1.msra.mxu0 0.0
    %379 = vmatprep.subr.mxu0 0.0
    %380 = vmatpush1.msra.mxu0 0.0
    %381 = vmatprep.subr.mxu0 0.0
    %382 = vmatpush1.msra.mxu0 0.0
    %383 = vmatprep.subr.mxu0 0.0
    %384 = vmatpush1.msra.mxu0 0.0
    %385 = vmatprep.subr.mxu0 0.0
    %386 = vmatpush1.msra.mxu0 0.0
    %387 = vmatprep.subr.mxu0 0.0
    %388 = vmatpush1.msra.mxu0 0.0
    %389 = vmatprep.subr.mxu0 0.0
    %390 = vmatpush1.msra.mxu0 0.0
    %391 = vmatprep.subr.mxu0 0.0
    %392 = vmatpush1.msra.mxu0 0.0
    %393 = vmatprep.subr.mxu0 0.0
    %394 = vmatpush1.msra.mxu0 0.0
    %395 = vmatprep.subr.mxu0 0.0
    %396 = vmatpush1.msra.mxu0 0.0
    %397 = vmatprep.subr.mxu0 0.0
    %398 = vmatpush1.msra.mxu0 0.0
    %399 = vmatprep.subr.mxu0 0.0
    %400 = vmatpush1.msra.mxu0 0.0
    %401 = vmatprep.subr.mxu0 0.0
    %402 = vmatpush1.msra.mxu0 0.0
    %403 = vmatprep.subr.mxu0 0.0
    %404 = vmatpush1.msra.mxu0 0.0
    %405 = vmatprep.subr.mxu0 0.0
    %406 = vmatpush1.msra.mxu0 0.0
    %407 = vmatprep.subr.mxu0 0.0
    %408 = vmatpush1.msra.mxu0 0.0
    %409 = vmatprep.subr.mxu0 0.0
    %410 = vmatpush1.msra.mxu0 0.0
    %411 = vmatprep.subr.mxu0 0.0
    %412 = vmatpush1.msra.mxu0 0.0
    %413 = vmatprep.subr.mxu0 0.0
    %414 = vmatpush1.msra.mxu0 0.0
    %415 = vmatprep.mubr.f32.mxu0 0.0
    %416 = vmatmul.mubr.f32.gmra.mrb[0].mxu0 %v184
    %v417 = vpop.f32.mrb[0].mxu0
    %v418 = vadd.f32 %v349, %v417
    %v419 = vpop.f32.mrb[0].mxu0
    %420 = vdwg.mxu0
    %v421 = vmax.f32 %v418, 0.0
    %v422 = vld [vmem:[%s8] sm:$0xff]
    %v423 = vld [vmem:[%s8 + $0x8] sm:$0xff]
    %v424 = vld [vmem:[%s8 + $0x10] sm:$0xff]
    %v425 = vld [vmem:[%s8 + $0x18] sm:$0xff]
    %v426 = vld [vmem:[#allocation11] sm:$0x1]
    %v428 = vlaneseq
    %v429 = vshrl.u32 %v428, 7
    %v430 = vsub.s32 0, %v429
    %v431 = vrot.slane %v426, %v430
    %v434 = vsel %vm268, %v421, 0
    %436 = vmatprep.subr.mxu0 0.0
    %437 = vmatpush1.msra.mxu0 %v422
    %438 = vmatprep.subr.mxu0 0.0
    %439 = vmatpush1.msra.mxu0 %v423
    %440 = vmatprep.subr.mxu0 0.0
    %441 = vmatpush1.msra.mxu0 %v424
    %442 = vmatprep.subr.mxu0 0.0
    %443 = vmatpush1.msra.mxu0 %v425
    %444 = vmatprep.subr.mxu0 0.0
    %445 = vmatpush1.msra.mxu0 0.0
    %446 = vmatprep.subr.mxu0 0.0
    %447 = vmatpush1.msra.mxu0 0.0
    %448 = vmatprep.subr.mxu0 0.0
    %449 = vmatpush1.msra.mxu0 0.0
    %450 = vmatprep.subr.mxu0 0.0
    %451 = vmatpush1.msra.mxu0 0.0
    %452 = vmatprep.subr.mxu0 0.0
    %453 = vmatpush1.msra.mxu0 0.0
    %454 = vmatprep.subr.mxu0 0.0
    %455 = vmatpush1.msra.mxu0 0.0
    %456 = vmatprep.subr.mxu0 0.0
    %457 = vmatpush1.msra.mxu0 0.0
    %458 = vmatprep.subr.mxu0 0.0
    %459 = vmatpush1.msra.mxu0 0.0
    %460 = vmatprep.subr.mxu0 0.0
    %461 = vmatpush1.msra.mxu0 0.0
    %462 = vmatprep.subr.mxu0 0.0
    %463 = vmatpush1.msra.mxu0 0.0
    %464 = vmatprep.subr.mxu0 0.0
    %465 = vmatpush1.msra.mxu0 0.0
    %466 = vmatprep.subr.mxu0 0.0
    %467 = vmatpush1.msra.mxu0 0.0
    %468 = vmatprep.subr.mxu0 0.0
    %469 = vmatpush1.msra.mxu0 0.0
    %470 = vmatprep.subr.mxu0 0.0
    %471 = vmatpush1.msra.mxu0 0.0
    %472 = vmatprep.subr.mxu0 0.0
    %473 = vmatpush1.msra.mxu0 0.0
    %474 = vmatprep.subr.mxu0 0.0
    %475 = vmatpush1.msra.mxu0 0.0
    %476 = vmatprep.subr.mxu0 0.0
    %477 = vmatpush1.msra.mxu0 0.0
    %478 = vmatprep.subr.mxu0 0.0
    %479 = vmatpush1.msra.mxu0 0.0
    %480 = vmatprep.subr.mxu0 0.0
    %481 = vmatpush1.msra.mxu0 0.0
    %482 = vmatprep.subr.mxu0 0.0
    %483 = vmatpush1.msra.mxu0 0.0
    %484 = vmatprep.subr.mxu0 0.0
    %485 = vmatpush1.msra.mxu0 0.0
    %486 = vmatprep.subr.mxu0 0.0
    %487 = vmatpush1.msra.mxu0 0.0
    %488 = vmatprep.subr.mxu0 0.0
    %489 = vmatpush1.msra.mxu0 0.0
    %490 = vmatprep.subr.mxu0 0.0
    %491 = vmatpush1.msra.mxu0 0.0
    %492 = vmatprep.subr.mxu0 0.0
    %493 = vmatpush1.msra.mxu0 0.0
    %494 = vmatprep.subr.mxu0 0.0
    %495 = vmatpush1.msra.mxu0 0.0
    %496 = vmatprep.subr.mxu0 0.0
    %497 = vmatpush1.msra.mxu0 0.0
    %498 = vmatprep.subr.mxu0 0.0
    %499 = vmatpush1.msra.mxu0 0.0
    %500 = vmatprep.mubr.f32.mxu0 0.0
    %501 = vmatmul.mubr.f32.gmra.mrb[0].mxu0 %v434
    %v502 = vpop.f32.mrb[0].mxu0
    %v503 = vadd.f32 %v431, %v502
    %v504 = vpop.f32.mrb[0].mxu0
    %505 = vdwg.mxu0
    %v506 = vmax.f32 %v503, 0.0
    %v507 = vld [vmem:[%s1] sm:$0xff]
    %v508 = vld [vmem:[%s1 + $0x8] sm:$0xff]
    %v509 = vld [vmem:[%s2] sm:$0xff]
    %v510 = vld [vmem:[%s2 + $0x8] sm:$0xff]
    %v512 = vsel %vm182, %v509, 0
    %v515 = vsel %vm182, %v510, 0
    %517 = vmatprep.subr.mxu0 0.0
    %518 = vmatpush1.msra.mxu0 %v506
    %519 = vmatprep.subr.mxu0 0.0
    %520 = vmatpush1.msra.mxu0 0.0
    %521 = vmatprep.subr.mxu0 0.0
    %522 = vmatpush1.msra.mxu0 0.0
    %523 = vmatprep.subr.mxu0 0.0
    %524 = vmatpush1.msra.mxu0 0.0
    %525 = vmatprep.subr.mxu0 0.0
    %526 = vmatpush1.msra.mxu0 0.0
    %527 = vmatprep.subr.mxu0 0.0
    %528 = vmatpush1.msra.mxu0 0.0
    %529 = vmatprep.subr.mxu0 0.0
    %530 = vmatpush1.msra.mxu0 0.0
    %531 = vmatprep.subr.mxu0 0.0
    %532 = vmatpush1.msra.mxu0 0.0
    %533 = vmatprep.subr.mxu0 0.0
    %534 = vmatpush1.msra.mxu0 0.0
    %535 = vmatprep.subr.mxu0 0.0
    %536 = vmatpush1.msra.mxu0 0.0
    %537 = vmatprep.subr.mxu0 0.0
    %538 = vmatpush1.msra.mxu0 0.0
    %539 = vmatprep.subr.mxu0 0.0
    %540 = vmatpush1.msra.mxu0 0.0
    %541 = vmatprep.subr.mxu0 0.0
    %542 = vmatpush1.msra.mxu0 0.0
    %543 = vmatprep.subr.mxu0 0.0
    %544 = vmatpush1.msra.mxu0 0.0
    %545 = vmatprep.subr.mxu0 0.0
    %546 = vmatpush1.msra.mxu0 0.0
    %547 = vmatprep.subr.mxu0 0.0
    %548 = vmatpush1.msra.mxu0 0.0
    %549 = vmatprep.subr.mxu0 0.0
    %550 = vmatpush1.msra.mxu0 0.0
    %551 = vmatprep.subr.mxu0 0.0
    %552 = vmatpush1.msra.mxu0 0.0
    %553 = vmatprep.subr.mxu0 0.0
    %554 = vmatpush1.msra.mxu0 0.0
    %555 = vmatprep.subr.mxu0 0.0
    %556 = vmatpush1.msra.mxu0 0.0
    %557 = vmatprep.subr.mxu0 0.0
    %558 = vmatpush1.msra.mxu0 0.0
    %559 = vmatprep.subr.mxu0 0.0
    %560 = vmatpush1.msra.mxu0 0.0
    %561 = vmatprep.subr.mxu0 0.0
    %562 = vmatpush1.msra.mxu0 0.0
    %563 = vmatprep.subr.mxu0 0.0
    %564 = vmatpush1.msra.mxu0 0.0
    %565 = vmatprep.subr.mxu0 0.0
    %566 = vmatpush1.msra.mxu0 0.0
    %567 = vmatprep.subr.mxu0 0.0
    %568 = vmatpush1.msra.mxu0 0.0
    %569 = vmatprep.subr.mxu0 0.0
    %570 = vmatpush1.msra.mxu0 0.0
    %571 = vmatprep.subr.mxu0 0.0
    %572 = vmatpush1.msra.mxu0 0.0
    %573 = vmatprep.subr.mxu0 0.0
    %574 = vmatpush1.msra.mxu0 0.0
    %575 = vmatprep.subr.mxu0 0.0
    %576 = vmatpush1.msra.mxu0 0.0
    %577 = vmatprep.subr.mxu0 0.0
    %578 = vmatpush1.msra.mxu0 0.0
    %579 = vmatprep.subr.mxu0 0.0
    %580 = vmatpush1.msra.mxu0 0.0
    %581 = vmatprep.mubr.f32.mxu0 0.0
    %582 = vmatmul.mubr.f32.gmra.mrb[0].mxu0 %v512
    %v583 = vpop.f32.mrb[0].mxu0
    %v584 = vadd.f32 0.0, %v583
    %v585 = vpop.f32.mrb[0].mxu0
    %586 = vmatprep.mubr.f32.mxu0 0.0
    %587 = vmatmul.mubr.f32.gmra.mrb[0].mxu0 %v515
    %v588 = vpop.f32.mrb[0].mxu0
    %v589 = vadd.f32 0.0, %v588
    %v590 = vpop.f32.mrb[0].mxu0
    %591 = vdwg.mxu0
    %v593 = vsel %vm182, %v507, 0
    %v596 = vsel %vm182, %v508, 0
    %598 = vmatprep.subr.mxu0 0.0
    %599 = vmatpush1.msra.mxu0 %v342
    %600 = vmatprep.subr.mxu0 0.0
    %601 = vmatpush1.msra.mxu0 0.0
    %602 = vmatprep.subr.mxu0 0.0
    %603 = vmatpush1.msra.mxu0 0.0
    %604 = vmatprep.subr.mxu0 0.0
    %605 = vmatpush1.msra.mxu0 0.0
    %606 = vmatprep.subr.mxu0 0.0
    %607 = vmatpush1.msra.mxu0 0.0
    %608 = vmatprep.subr.mxu0 0.0
    %609 = vmatpush1.msra.mxu0 0.0
    %610 = vmatprep.subr.mxu0 0.0
    %611 = vmatpush1.msra.mxu0 0.0
    %612 = vmatprep.subr.mxu0 0.0
    %613 = vmatpush1.msra.mxu0 0.0
    %614 = vmatprep.subr.mxu0 0.0
    %615 = vmatpush1.msra.mxu0 0.0
    %616 = vmatprep.subr.mxu0 0.0
    %617 = vmatpush1.msra.mxu0 0.0
    %618 = vmatprep.subr.mxu0 0.0
    %619 = vmatpush1.msra.mxu0 0.0
    %620 = vmatprep.subr.mxu0 0.0
    %621 = vmatpush1.msra.mxu0 0.0
    %622 = vmatprep.subr.mxu0 0.0
    %623 = vmatpush1.msra.mxu0 0.0
    %624 = vmatprep.subr.mxu0 0.0
    %625 = vmatpush1.msra.mxu0 0.0
    %626 = vmatprep.subr.mxu0 0.0
    %627 = vmatpush1.msra.mxu0 0.0
    %628 = vmatprep.subr.mxu0 0.0
    %629 = vmatpush1.msra.mxu0 0.0
    %630 = vmatprep.subr.mxu0 0.0
    %631 = vmatpush1.msra.mxu0 0.0
    %632 = vmatprep.subr.mxu0 0.0
    %633 = vmatpush1.msra.mxu0 0.0
    %634 = vmatprep.subr.mxu0 0.0
    %635 = vmatpush1.msra.mxu0 0.0
    %636 = vmatprep.subr.mxu0 0.0
    %637 = vmatpush1.msra.mxu0 0.0
    %638 = vmatprep.subr.mxu0 0.0
    %639 = vmatpush1.msra.mxu0 0.0
    %640 = vmatprep.subr.mxu0 0.0
    %641 = vmatpush1.msra.mxu0 0.0
    %642 = vmatprep.subr.mxu0 0.0
    %643 = vmatpush1.msra.mxu0 0.0
    %644 = vmatprep.subr.mxu0 0.0
    %645 = vmatpush1.msra.mxu0 0.0
    %646 = vmatprep.subr.mxu0 0.0
    %647 = vmatpush1.msra.mxu0 0.0
    %648 = vmatprep.subr.mxu0 0.0
    %649 = vmatpush1.msra.mxu0 0.0
    %650 = vmatprep.subr.mxu0 0.0
    %651 = vmatpush1.msra.mxu0 0.0
    %652 = vmatprep.subr.mxu0 0.0
    %653 = vmatpush1.msra.mxu0 0.0
    %654 = vmatprep.subr.mxu0 0.0
    %655 = vmatpush1.msra.mxu0 0.0
    %656 = vmatprep.subr.mxu0 0.0
    %657 = vmatpush1.msra.mxu0 0.0
    %658 = vmatprep.subr.mxu0 0.0
    %659 = vmatpush1.msra.mxu0 0.0
    %660 = vmatprep.subr.mxu0 0.0
    %661 = vmatpush1.msra.mxu0 0.0
    %662 = vmatprep.mubr.f32.mxu0 0.0
    %663 = vmatmul.mubr.f32.gmra.mrb[0].mxu0 %v593
    %v664 = vpop.f32.mrb[0].mxu0
    %v665 = vadd.f32 %v584, %v664
    %v666 = vpop.f32.mrb[0].mxu0
    %667 = vmatprep.mubr.f32.mxu0 0.0
    %668 = vmatmul.mubr.f32.gmra.mrb[0].mxu0 %v596
    %v669 = vpop.f32.mrb[0].mxu0
    %v670 = vadd.f32 %v589, %v669
    %v671 = vpop.f32.mrb[0].mxu0
    %672 = vdwg.mxu0
    %v673 = vld [vmem:[#allocation13] sm:$0xff]
    %v674 = vld [vmem:[#allocation13 + $0x8] sm:$0xff]
    %v675 = vld [vmem:[#allocation13 + $0x10] sm:$0xff]
    %v676 = vld [vmem:[#allocation13 + $0x18] sm:$0xff]
    %v677 = vld [vmem:[%s14] sm:$0x1]
    %v679 = vlaneseq
    %v680 = vshrl.u32 %v679, 7
    %v681 = vsub.s32 0, %v680
    %v682 = vrot.slane %v677, %v681
    %v685 = vsel %vm268, %v665, 0
    %v688 = vsel %vm268, %v670, 0
    %690 = vmatprep.subr.mxu0 0.0
    %691 = vmatpush1.msra.mxu0 %v673
    %692 = vmatprep.subr.mxu0 0.0
    %693 = vmatpush1.msra.mxu0 %v674
    %694 = vmatprep.subr.mxu0 0.0
    %695 = vmatpush1.msra.mxu0 %v675
    %696 = vmatprep.subr.mxu0 0.0
    %697 = vmatpush1.msra.mxu0 %v676
    %698 = vmatprep.subr.mxu0 0.0
    %699 = vmatpush1.msra.mxu0 0.0
    %700 = vmatprep.subr.mxu0 0.0
    %701 = vmatpush1.msra.mxu0 0.0
    %702 = vmatprep.subr.mxu0 0.0
    %703 = vmatpush1.msra.mxu0 0.0
    %704 = vmatprep.subr.mxu0 0.0
    %705 = vmatpush1.msra.mxu0 0.0
    %706 = vmatprep.subr.mxu0 0.0
    %707 = vmatpush1.msra.mxu0 0.0
    %708 = vmatprep.subr.mxu0 0.0
    %709 = vmatpush1.msra.mxu0 0.0
    %710 = vmatprep.subr.mxu0 0.0
    %711 = vmatpush1.msra.mxu0 0.0
    %712 = vmatprep.subr.mxu0 0.0
    %713 = vmatpush1.msra.mxu0 0.0
    %714 = vmatprep.subr.mxu0 0.0
    %715 = vmatpush1.msra.mxu0 0.0
    %716 = vmatprep.subr.mxu0 0.0
    %717 = vmatpush1.msra.mxu0 0.0
    %718 = vmatprep.subr.mxu0 0.0
    %719 = vmatpush1.msra.mxu0 0.0
    %720 = vmatprep.subr.mxu0 0.0
    %721 = vmatpush1.msra.mxu0 0.0
    %722 = vmatprep.subr.mxu0 0.0
    %723 = vmatpush1.msra.mxu0 0.0
    %724 = vmatprep.subr.mxu0 0.0
    %725 = vmatpush1.msra.mxu0 0.0
    %726 = vmatprep.subr.mxu0 0.0
    %727 = vmatpush1.msra.mxu0 0.0
    %728 = vmatprep.subr.mxu0 0.0
    %729 = vmatpush1.msra.mxu0 0.0
    %730 = vmatprep.subr.mxu0 0.0
    %731 = vmatpush1.msra.mxu0 0.0
    %732 = vmatprep.subr.mxu0 0.0
    %733 = vmatpush1.msra.mxu0 0.0
    %734 = vmatprep.subr.mxu0 0.0
    %735 = vmatpush1.msra.mxu0 0.0
    %736 = vmatprep.subr.mxu0 0.0
    %737 = vmatpush1.msra.mxu0 0.0
    %738 = vmatprep.subr.mxu0 0.0
    %739 = vmatpush1.msra.mxu0 0.0
    %740 = vmatprep.subr.mxu0 0.0
    %741 = vmatpush1.msra.mxu0 0.0
    %742 = vmatprep.subr.mxu0 0.0
    %743 = vmatpush1.msra.mxu0 0.0
    %744 = vmatprep.subr.mxu0 0.0
    %745 = vmatpush1.msra.mxu0 0.0
    %746 = vmatprep.subr.mxu0 0.0
    %747 = vmatpush1.msra.mxu0 0.0
    %748 = vmatprep.subr.mxu0 0.0
    %749 = vmatpush1.msra.mxu0 0.0
    %750 = vmatprep.subr.mxu0 0.0
    %751 = vmatpush1.msra.mxu0 0.0
    %752 = vmatprep.subr.mxu0 0.0
    %753 = vmatpush1.msra.mxu0 0.0
    %754 = vmatprep.mubr.f32.mxu0 0.0
    %755 = vmatmul.mubr.f32.gmra.mrb[0].mxu0 %v685
    %v756 = vpop.f32.mrb[0].mxu0
    %v757 = vadd.f32 %v682, %v756
    %v758 = vpop.f32.mrb[0].mxu0
    %759 = vmatprep.mubr.f32.mxu0 0.0
    %760 = vmatmul.mubr.f32.gmra.mrb[0].mxu0 %v688
    %v761 = vpop.f32.mrb[0].mxu0
    %v762 = vadd.f32 %v682, %v761
    %v763 = vpop.f32.mrb[0].mxu0
    %764 = vdwg.mxu0
    %v765 = vld [vmem:[#allocation14] sm:$0xff]
    %v766 = vld [vmem:[#allocation14 + $0x8] sm:$0xff]
    %v767 = vld [vmem:[#allocation14 + $0x10] sm:$0xff]
    %v768 = vld [vmem:[#allocation14 + $0x18] sm:$0xff]
    %v769 = vld [vmem:[%s15] sm:$0x1]
    %v771 = vlaneseq
    %v772 = vshrl.u32 %v771, 7
    %v773 = vsub.s32 0, %v772
    %v774 = vrot.slane %v769, %v773
    %776 = vmatprep.subr.mxu0 0.0
    %777 = vmatpush1.msra.mxu0 %v765
    %778 = vmatprep.subr.mxu0 0.0
    %779 = vmatpush1.msra.mxu0 %v766
    %780 = vmatprep.subr.mxu0 0.0
    %781 = vmatpush1.msra.mxu0 %v767
    %782 = vmatprep.subr.mxu0 0.0
    %783 = vmatpush1.msra.mxu0 %v768
    %784 = vmatprep.subr.mxu0 0.0
    %785 = vmatpush1.msra.mxu0 0.0
    %786 = vmatprep.subr.mxu0 0.0
    %787 = vmatpush1.msra.mxu0 0.0
    %788 = vmatprep.subr.mxu0 0.0
    %789 = vmatpush1.msra.mxu0 0.0
    %790 = vmatprep.subr.mxu0 0.0
    %791 = vmatpush1.msra.mxu0 0.0
    %792 = vmatprep.subr.mxu0 0.0
    %793 = vmatpush1.msra.mxu0 0.0
    %794 = vmatprep.subr.mxu0 0.0
    %795 = vmatpush1.msra.mxu0 0.0
    %796 = vmatprep.subr.mxu0 0.0
    %797 = vmatpush1.msra.mxu0 0.0
    %798 = vmatprep.subr.mxu0 0.0
    %799 = vmatpush1.msra.mxu0 0.0
    %800 = vmatprep.subr.mxu0 0.0
    %801 = vmatpush1.msra.mxu0 0.0
    %802 = vmatprep.subr.mxu0 0.0
    %803 = vmatpush1.msra.mxu0 0.0
    %804 = vmatprep.subr.mxu0 0.0
    %805 = vmatpush1.msra.mxu0 0.0
    %806 = vmatprep.subr.mxu0 0.0
    %807 = vmatpush1.msra.mxu0 0.0
    %808 = vmatprep.subr.mxu0 0.0
    %809 = vmatpush1.msra.mxu0 0.0
    %810 = vmatprep.subr.mxu0 0.0
    %811 = vmatpush1.msra.mxu0 0.0
    %812 = vmatprep.subr.mxu0 0.0
    %813 = vmatpush1.msra.mxu0 0.0
    %814 = vmatprep.subr.mxu0 0.0
    %815 = vmatpush1.msra.mxu0 0.0
    %816 = vmatprep.subr.mxu0 0.0
    %817 = vmatpush1.msra.mxu0 0.0
    %818 = vmatprep.subr.mxu0 0.0
    %819 = vmatpush1.msra.mxu0 0.0
    %820 = vmatprep.subr.mxu0 0.0
    %821 = vmatpush1.msra.mxu0 0.0
    %822 = vmatprep.subr.mxu0 0.0
    %823 = vmatpush1.msra.mxu0 0.0
    %824 = vmatprep.subr.mxu0 0.0
    %825 = vmatpush1.msra.mxu0 0.0
    %826 = vmatprep.subr.mxu0 0.0
    %827 = vmatpush1.msra.mxu0 0.0
    %828 = vmatprep.subr.mxu0 0.0
    %829 = vmatpush1.msra.mxu0 0.0
    %830 = vmatprep.subr.mxu0 0.0
    %831 = vmatpush1.msra.mxu0 0.0
    %832 = vmatprep.subr.mxu0 0.0
    %833 = vmatpush1.msra.mxu0 0.0
    %834 = vmatprep.subr.mxu0 0.0
    %835 = vmatpush1.msra.mxu0 0.0
    %836 = vmatprep.subr.mxu0 0.0
    %837 = vmatpush1.msra.mxu0 0.0
    %838 = vmatprep.subr.mxu0 0.0
    %839 = vmatpush1.msra.mxu0 0.0
    %840 = vmatprep.mubr.f32.mxu0 0.0
    %841 = vmatmul.mubr.f32.gmra.mrb[0].mxu0 %v685
    %v842 = vpop.f32.mrb[0].mxu0
    %v843 = vadd.f32 %v774, %v842
    %v844 = vpop.f32.mrb[0].mxu0
    %845 = vmatprep.mubr.f32.mxu0 0.0
    %846 = vmatmul.mubr.f32.gmra.mrb[0].mxu0 %v688
    %v847 = vpop.f32.mrb[0].mxu0
    %v848 = vadd.f32 %v774, %v847
    %v849 = vpop.f32.mrb[0].mxu0
    %850 = vdwg.mxu0
    %v851 = vld [vmem:[%s13] sm:$0xff]
    %v852 = vld [vmem:[%s13 + $0x8] sm:$0xff]
    %v853 = vld [vmem:[%s13 + $0x10] sm:$0xff]
    %v854 = vld [vmem:[%s13 + $0x18] sm:$0xff]
    %v855 = vld [vmem:[%s16] sm:$0x1]
    %v857 = vlaneseq
    %v858 = vshrl.u32 %v857, 7
    %v859 = vsub.s32 0, %v858
    %v860 = vrot.slane %v855, %v859
    %862 = vmatprep.subr.mxu0 0.0
    %863 = vmatpush1.msra.mxu0 %v851
    %864 = vmatprep.subr.mxu0 0.0
    %865 = vmatpush1.msra.mxu0 %v852
    %866 = vmatprep.subr.mxu0 0.0
    %867 = vmatpush1.msra.mxu0 %v853
    %868 = vmatprep.subr.mxu0 0.0
    %869 = vmatpush1.msra.mxu0 %v854
    %870 = vmatprep.subr.mxu0 0.0
    %871 = vmatpush1.msra.mxu0 0.0
    %872 = vmatprep.subr.mxu0 0.0
    %873 = vmatpush1.msra.mxu0 0.0
    %874 = vmatprep.subr.mxu0 0.0
    %875 = vmatpush1.msra.mxu0 0.0
    %876 = vmatprep.subr.mxu0 0.0
    %877 = vmatpush1.msra.mxu0 0.0
    %878 = vmatprep.subr.mxu0 0.0
    %879 = vmatpush1.msra.mxu0 0.0
    %880 = vmatprep.subr.mxu0 0.0
    %881 = vmatpush1.msra.mxu0 0.0
    %882 = vmatprep.subr.mxu0 0.0
    %883 = vmatpush1.msra.mxu0 0.0
    %884 = vmatprep.subr.mxu0 0.0
    %885 = vmatpush1.msra.mxu0 0.0
    %886 = vmatprep.subr.mxu0 0.0
    %887 = vmatpush1.msra.mxu0 0.0
    %888 = vmatprep.subr.mxu0 0.0
    %889 = vmatpush1.msra.mxu0 0.0
    %890 = vmatprep.subr.mxu0 0.0
    %891 = vmatpush1.msra.mxu0 0.0
    %892 = vmatprep.subr.mxu0 0.0
    %893 = vmatpush1.msra.mxu0 0.0
    %894 = vmatprep.subr.mxu0 0.0
    %895 = vmatpush1.msra.mxu0 0.0
    %896 = vmatprep.subr.mxu0 0.0
    %897 = vmatpush1.msra.mxu0 0.0
    %898 = vmatprep.subr.mxu0 0.0
    %899 = vmatpush1.msra.mxu0 0.0
    %900 = vmatprep.subr.mxu0 0.0
    %901 = vmatpush1.msra.mxu0 0.0
    %902 = vmatprep.subr.mxu0 0.0
    %903 = vmatpush1.msra.mxu0 0.0
    %904 = vmatprep.subr.mxu0 0.0
    %905 = vmatpush1.msra.mxu0 0.0
    %906 = vmatprep.subr.mxu0 0.0
    %907 = vmatpush1.msra.mxu0 0.0
    %908 = vmatprep.subr.mxu0 0.0
    %909 = vmatpush1.msra.mxu0 0.0
    %910 = vmatprep.subr.mxu0 0.0
    %911 = vmatpush1.msra.mxu0 0.0
    %912 = vmatprep.subr.mxu0 0.0
    %913 = vmatpush1.msra.mxu0 0.0
    %914 = vmatprep.subr.mxu0 0.0
    %915 = vmatpush1.msra.mxu0 0.0
    %916 = vmatprep.subr.mxu0 0.0
    %917 = vmatpush1.msra.mxu0 0.0
    %918 = vmatprep.subr.mxu0 0.0
    %919 = vmatpush1.msra.mxu0 0.0
    %920 = vmatprep.subr.mxu0 0.0
    %921 = vmatpush1.msra.mxu0 0.0
    %922 = vmatprep.subr.mxu0 0.0
    %923 = vmatpush1.msra.mxu0 0.0
    %924 = vmatprep.subr.mxu0 0.0
    %925 = vmatpush1.msra.mxu0 0.0
    %926 = vmatprep.mubr.f32.mxu0 0.0
    %927 = vmatmul.mubr.f32.gmra.mrb[0].mxu0 %v685
    %v928 = vpop.f32.mrb[0].mxu0
    %v929 = vadd.f32 %v860, %v928
    %v930 = vpop.f32.mrb[0].mxu0
    %931 = vmatprep.mubr.f32.mxu0 0.0
    %932 = vmatmul.mubr.f32.gmra.mrb[0].mxu0 %v688
    %v933 = vpop.f32.mrb[0].mxu0
    %v934 = vadd.f32 %v860, %v933
    %v935 = vpop.f32.mrb[0].mxu0
    %936 = vdwg.mxu0
    %v937 = vmul.f32 %v757, %v843
    %v938 = vsel %vm268, %v937, 0.0
    %939 = vadd.xlane.f32.xlu0 %v938
    %v940 = vpop.xlane.xlu0 %939
    %v941 = vmul.f32 %v757, %v848
    %v942 = vsel %vm268, %v941, 0.0
    %943 = vadd.xlane.f32.xlu0 %v942
    %v944 = vpop.xlane.xlu0 %943
    %v945 = vmul.f32 %v762, %v843
    %v946 = vsel %vm268, %v945, 0.0
    %947 = vadd.xlane.f32.xlu0 %v946
    %v948 = vpop.xlane.xlu0 %947
    %v949 = vmul.f32 %v762, %v848
    %v950 = vsel %vm268, %v949, 0.0
    %951 = vadd.xlane.f32.xlu0 %v950
    %v952 = vpop.xlane.xlu0 %951
    %v953 = vmax.f32 %v940, %v944
    %v954 = vsub.f32 %v940, %v953
    %v955 = vmul.f32 %v954, 1.442695
    %v956 = vpow.pop %v955
    %v957 = vsub.f32 %v944, %v953
    %v958 = vmul.f32 %v957, 1.442695
    %v959 = vpow.pop %v958
    %v960 = vadd.f32 %v956, %v959
    %v961 = vrcp.pop %v960
    %v962 = vmax.f32 %v948, %v952
    %v963 = vsub.f32 %v948, %v962
    %v964 = vmul.f32 %v963, 1.442695
    %v965 = vpow.pop %v964
    %v966 = vsub.f32 %v952, %v962
    %v967 = vmul.f32 %v966, 1.442695
    %v968 = vpow.pop %v967
    %v969 = vadd.f32 %v965, %v968
    %v970 = vrcp.pop %v969
    %v971 = vmul.f32 %v956, %v961
    %v972 = vmul.f32 %v971, %v929
    %v973 = vmul.f32 %v959, %v961
    %v974 = vmul.f32 %v973, %v934
    %v975 = vadd.f32 %v972, %v974
    %v976 = vmul.f32 %v965, %v970
    %v977 = vmul.f32 %v976, %v929
    %v978 = vadd.f32 %v975, %v977
    %v979 = vmul.f32 %v968, %v970
    %v980 = vmul.f32 %v979, %v934
    %v981 = vadd.f32 %v978, %v980
    %v982 = vmul.f32 %v981, 0.5
    %v983 = vld [vmem:[#allocation16] sm:$0xff]
    %v984 = vld [vmem:[#allocation16 + $0x8] sm:$0xff]
    %v985 = vld [vmem:[#allocation16 + $0x10] sm:$0xff]
    %v986 = vld [vmem:[#allocation16 + $0x18] sm:$0xff]
    %v987 = vld [vmem:[%s18] sm:$0x1]
    %v989 = vlaneseq
    %v990 = vshrl.u32 %v989, 7
    %v991 = vsub.s32 0, %v990
    %v992 = vrot.slane %v987, %v991
    %v995 = vsel %vm268, %v982, 0
    %997 = vmatprep.subr.mxu0 0.0
    %998 = vmatpush1.msra.mxu0 %v983
    %999 = vmatprep.subr.mxu0 0.0
    %1000 = vmatpush1.msra.mxu0 %v984
    %1001 = vmatprep.subr.mxu0 0.0
    %1002 = vmatpush1.msra.mxu0 %v985
    %1003 = vmatprep.subr.mxu0 0.0
    %1004 = vmatpush1.msra.mxu0 %v986
    %1005 = vmatprep.subr.mxu0 0.0
    %1006 = vmatpush1.msra.mxu0 0.0
    %1007 = vmatprep.subr.mxu0 0.0
    %1008 = vmatpush1.msra.mxu0 0.0
    %1009 = vmatprep.subr.mxu0 0.0
    %1010 = vmatpush1.msra.mxu0 0.0
    %1011 = vmatprep.subr.mxu0 0.0
    %1012 = vmatpush1.msra.mxu0 0.0
    %1013 = vmatprep.subr.mxu0 0.0
    %1014 = vmatpush1.msra.mxu0 0.0
    %1015 = vmatprep.subr.mxu0 0.0
    %1016 = vmatpush1.msra.mxu0 0.0
    %1017 = vmatprep.subr.mxu0 0.0
    %1018 = vmatpush1.msra.mxu0 0.0
    %1019 = vmatprep.subr.mxu0 0.0
    %1020 = vmatpush1.msra.mxu0 0.0
    %1021 = vmatprep.subr.mxu0 0.0
    %1022 = vmatpush1.msra.mxu0 0.0
    %1023 = vmatprep.subr.mxu0 0.0
    %1024 = vmatpush1.msra.mxu0 0.0
    %1025 = vmatprep.subr.mxu0 0.0
    %1026 = vmatpush1.msra.mxu0 0.0
    %1027 = vmatprep.subr.mxu0 0.0
    %1028 = vmatpush1.msra.mxu0 0.0
    %1029 = vmatprep.subr.mxu0 0.0
    %1030 = vmatpush1.msra.mxu0 0.0
    %1031 = vmatprep.subr.mxu0 0.0
    %1032 = vmatpush1.msra.mxu0 0.0
    %1033 = vmatprep.subr.mxu0 0.0
    %1034 = vmatpush1.msra.mxu0 0.0
    %1035 = vmatprep.subr.mxu0 0.0
    %1036 = vmatpush1.msra.mxu0 0.0
    %1037 = vmatprep.subr.mxu0 0.0
    %1038 = vmatpush1.msra.mxu0 0.0
    %1039 = vmatprep.subr.mxu0 0.0
    %1040 = vmatpush1.msra.mxu0 0.0
    %1041 = vmatprep.subr.mxu0 0.0
    %1042 = vmatpush1.msra.mxu0 0.0
    %1043 = vmatprep.subr.mxu0 0.0
    %1044 = vmatpush1.msra.mxu0 0.0
    %1045 = vmatprep.subr.mxu0 0.0
    %1046 = vmatpush1.msra.mxu0 0.0
    %1047 = vmatprep.subr.mxu0 0.0
    %1048 = vmatpush1.msra.mxu0 0.0
    %1049 = vmatprep.subr.mxu0 0.0
    %1050 = vmatpush1.msra.mxu0 0.0
    %1051 = vmatprep.subr.mxu0 0.0
    %1052 = vmatpush1.msra.mxu0 0.0
    %1053 = vmatprep.subr.mxu0 0.0
    %1054 = vmatpush1.msra.mxu0 0.0
    %1055 = vmatprep.subr.mxu0 0.0
    %1056 = vmatpush1.msra.mxu0 0.0
    %1057 = vmatprep.subr.mxu0 0.0
    %1058 = vmatpush1.msra.mxu0 0.0
    %1059 = vmatprep.subr.mxu0 0.0
    %1060 = vmatpush1.msra.mxu0 0.0
    %1061 = vmatprep.mubr.f32.mxu0 0.0
    %1062 = vmatmul.mubr.f32.gmra.mrb[0].mxu0 %v995
    %v1063 = vpop.f32.mrb[0].mxu0
    %v1064 = vadd.f32 %v992, %v1063
    %v1065 = vpop.f32.mrb[0].mxu0
    %1066 = vdwg.mxu0
    %v1068 = vcombine.high %v1064, %v1064
    %vm1070 = vcmask 257024
    %1071 = vst.msk [vmem:[#allocation17] sm:$0xf] %vm1070, %v1064
    %1072 = vst.msk [vmem:[#allocation17 + $0x4] sm:$0xf] %vm1070, %v1068
    // Predicated region
    $region114: #{tpu_custom_call.1} parent=1 // pred_check
      _
    $region115: #{tpu_custom_call.1} parent=1 // pred_check_branch
      %1074 = sbr.rel (0) target = $region117
    $region116: #{tpu_custom_call.1} parent=1 // pred_region
      %s1076 = ssub.s32 128, 128
      %1077 = vsyncadd [#allocation4], %s1076
      %s1078 = sshll.u32 [#allocation17], 4
      %s1079 = int_to_ptr.vmem [resolvable:$true] %s1078
      %1084 = dma.vmem_to_hbm [thread:$0]  %s1079, 128, %s19, [#allocation4], 64, 64, 4
    $region117: #{tpu_custom_call.1} parent=1 // pred_fallthru
      _
    // Predicated region
    $region118: #{tpu_custom_call.1} parent=1 // pred_check
      _
    $region119: #{tpu_custom_call.1} parent=1 // pred_check_branch
      %1086 = sbr.rel (0) target = $region121
    $region120: #{tpu_custom_call.1} parent=1 // pred_region
      %1087 = dma.done [#allocation4], 128
    $region121: #{tpu_custom_call.1} parent=1 // pred_fallthru
      _
    %1088 = vsyncpa [#allocation3], 1
    %1089 = vsyncpa [#allocation6], 1
    %1090 = vsyncpa [#allocation9], 1
    %1091 = vsyncpa [#allocation12], 1
    %1092 = vsyncpa [#allocation15], 1
    %1093 = vsyncpa [#allocation4], 1

</llo_original>
